<compile_context>
chip_gen: v5e
topology: v5e:2x2
jax: 0.10.0
libtpu: 0.0.40
codegen_flags: <defaults>
</compile_context>

<pallas_src>
import functools
import warnings

import jax
import jax.numpy as jnp
from jax.experimental import pallas as pl
from jax.experimental.pallas import tpu as pltpu

LN_EPS = 1e-5


def _merge_reduce_norm_kernel(x_ref, w_ref, g_ref, b_ref, o_ref, *, rows, c2):
    # x_ref: (tbz, 2, tH2, 2, W2, 2C) in the caller's dtype (f32 or bf16);
    #        dims 1 / 3 are the z / h parities, the w parity is already folded
    #        into the 2C lane dim.
    # w_ref: (4, 2C, 2C) bf16, indexed by zp + 2*hp.
    # g_ref, b_ref: (1, 2C) f32.
    # o_ref: (tbz, tH2*W2, 2C) in the caller's dtype.
    src = x_ref
    if x_ref.dtype != jnp.bfloat16:
        # Single in-VMEM cast of the whole block per grid step (not four
        # separate per-parity cast passes).  bf16 inputs skip this entirely.
        src = x_ref[...].astype(jnp.bfloat16)

    acc = jnp.zeros((rows, c2), dtype=jnp.float32)
    # TODO(synk): on v5e at large C a single big-K contraction / explicit MXU
    # accumulation would drop 3 full-width f32 adds; on v6e/v7x this loop is
    # filler under the HBM bottleneck.
    for hp in range(2):
        for zp in range(2):
            # NOTE: the (tbz, tH2, W2, 2C) -> (rows, 2C) collapse is a free
            # sublane-aligned reshape when W2 is a multiple of the sublane
            # pack (16 for bf16); otherwise it costs an XLU relayout.
            xp = src[:, zp, :, hp, :, :].reshape(rows, c2)
            acc = acc + jnp.dot(
                xp, w_ref[zp + 2 * hp], preferred_element_type=jnp.float32
            )

    # LayerNorm(2C): f32 math, two-pass (mean-subtract then square) variance,
    # matching PyTorch LayerNorm more closely than E[x^2]-E[x]^2.
    mean = jnp.mean(acc, axis=-1, keepdims=True)
    xc = acc - mean
    var = jnp.mean(xc * xc, axis=-1, keepdims=True)
    y = xc * jax.lax.rsqrt(var + LN_EPS)
    y = y * g_ref[...] + b_ref[...]
    o_ref[...] = y.reshape(o_ref.shape).astype(o_ref.dtype)


def _vmem_config():
    """Returns (vmem_limit_bytes, tile_budget_bytes) per TPU generation."""
    cap = None
    try:
        cap = getattr(pltpu.get_tpu_info(), "vmem_capacity_bytes", None)
    except Exception:
        cap = None
    if cap is not None and cap >= 128 * 1024 * 1024:  # v5e / v6e
        return 96 * 1024 * 1024, 64 * 1024 * 1024
    # v7x (64 MiB physical VMEM) or unknown backend: stay conservative.
    return 32 * 1024 * 1024, 20 * 1024 * 1024


def _pick_tiles(bz2, h2, w2, c, in_item, out_item, budget):
    """Pick (tbz, tH2): (batch, z/2) slabs per step and an H/2 sub-tile.

    Largest slab under the VMEM budget and a ~1k-row target, keeping the grid
    at >= min(4, BZ2) steps (>= 2 per TensorCore on dual-TC v7x).  If even a
    single slab does not fit, fall back to sublane-aligned H/2 tiling."""
    c2, c8 = 2 * c, 8 * c
    # Grid-invariant operands, conservatively counted as double-buffered.
    w_bytes = 2 * (4 * c2 * c2 * 2 + 2 * c2 * 4)

    def fits(tbz, th2):
        rows = tbz * th2 * w2
        blk_in = rows * c8 * in_item            # one pipeline buffer, input
        blk_out = rows * c2 * out_item          # one pipeline buffer, output
        cast_tmp = rows * c8 * 2 if in_item > 2 else 0   # f32 -> bf16 copy
        ln_tmp = rows * c2 * (2 + 4 * 4)        # bf16 parity slice + f32 temps
        return w_bytes + 2 * (blk_in + blk_out) + cast_tmp + ln_tmp <= budget

    rows_per_bz = h2 * w2
    target_rows = 1024
    min_steps = min(4, bz2)                     # >= 2 steps per TC on v7x

    tbz = 1
    for d in range(1, bz2 + 1):
        if bz2 % d:
            continue
        if bz2 // d < min_steps:
            break
        if d > 1 and d * rows_per_bz > target_rows:
            break
        if fits(d, h2):
            tbz = d

    th2 = h2
    if tbz == 1 and not fits(1, h2):
        # Sub-H2 fallback (mainly large spatial stages on v7x's 64 MiB VMEM).
        # Keep the output block's second-minor dim (tH2*W2) sublane-aligned.
        sub = 8 if out_item >= 4 else 16
        aligned = [d for d in range(1, h2)
                   if h2 % d == 0 and (d * w2) % sub == 0]
        if aligned:
            th2 = aligned[0]                    # smallest aligned (min VMEM)
            for d in aligned:
                if fits(1, d):
                    th2 = d                     # largest aligned that fits
    return tbz, th2


@functools.partial(jax.jit, static_argnames=("input_resolution",))
def patch_merging_forward(x, w_reduction, ln_gamma, ln_beta, *, input_resolution):
    """x: (B, Z*H*W, C) -> (B, (Z/2)(H/2)(W/2), 2C); output dtype == x.dtype.

    w_reduction: (8C, 2C) == nn.Linear(8C, 2C, bias=False).weight.T."""
    Z, H, W = input_resolution
    B, L, C = x.shape
    assert L == Z * H * W
    assert Z % 2 == 0 and H % 2 == 0 and W % 2 == 0

    Z2, H2, W2 = Z // 2, H // 2, W // 2
    C2 = 2 * C
    BZ2 = B * Z2
    rows_per_bz = H2 * W2

    if C2 < 128:
        # TODO(synk): lane-dense output repack for 2C < 128 (stores lower to
        # masked vst.msk); realistic Swin stages have 2C >= 128.
        warnings.warn(
            "PatchMerging Pallas kernel: 2C = %d < 128 lanes; output stores "
            "will be partially masked." % C2)

    # Free, contiguous reinterpretation: the w-parity folds into channels.
    x6 = x.reshape(BZ2, 2, H2, 2, W2, C2)

    # (4, 2C, 2C): w4[zp + 2*hp] stacks the weight rows for (zp, hp, w-even)
    # on top of those for (zp, hp, w-odd), matching the 2C lane layout of x6.
    w8 = w_reduction.reshape(8, C, C2)
    w4 = jnp.concatenate([w8[0:4], w8[4:8]], axis=1).astype(jnp.bfloat16)

    g2d = ln_gamma.reshape(1, C2).astype(jnp.float32)
    b2d = ln_beta.reshape(1, C2).astype(jnp.float32)

    vmem_limit, budget = _vmem_config()
    item = jnp.dtype(x.dtype).itemsize
    tbz, tH2 = _pick_tiles(BZ2, H2, W2, C, item, item, budget)
    rows = tbz * tH2 * W2
    grid = (BZ2 // tbz, H2 // tH2)

    kernel = functools.partial(_merge_reduce_norm_kernel, rows=rows, c2=C2)

    out = pl.pallas_call(
        kernel,
        out_shape=jax.ShapeDtypeStruct((BZ2, rows_per_bz, C2), x.dtype),
        grid_spec=pltpu.PrefetchScalarGridSpec(
            num_scalar_prefetch=0,
            grid=grid,
            in_specs=[
                pl.BlockSpec((tbz, 2, tH2, 2, W2, C2),
                             lambda i, j: (i, 0, j, 0, 0, 0)),
                pl.BlockSpec((4, C2, C2), lambda i, j: (0, 0, 0)),
                pl.BlockSpec((1, C2), lambda i, j: (0, 0)),
                pl.BlockSpec((1, C2), lambda i, j: (0, 0)),
            ],
            out_specs=pl.BlockSpec((tbz, tH2 * W2, C2),
                                   lambda i, j: (i, j, 0)),
        ),
        compiler_params=pltpu.CompilerParams(
            dimension_semantics=("parallel", "parallel"),
            vmem_limit_bytes=vmem_limit,
        ),
    )(x6, w4, g2d, b2d)

    return out.reshape(B, Z2 * rows_per_bz, C2)


def reference_forward(x, w_reduction, ln_gamma, ln_beta, input_resolution):
    """Pure-JAX (f32) reference mirroring the PyTorch forward."""
    Z, H, W = input_resolution
    B, L, C = x.shape
    xv = x.astype(jnp.float32).reshape(B, Z, H, W, C)
    parts = [
        xv[:, 0::2, 0::2, 0::2, :],
        xv[:, 1::2, 0::2, 0::2, :],
        xv[:, 0::2, 1::2, 0::2, :],
        xv[:, 1::2, 1::2, 0::2, :],
        xv[:, 0::2, 0::2, 1::2, :],
        xv[:, 1::2, 0::2, 1::2, :],
        xv[:, 0::2, 1::2, 1::2, :],
        xv[:, 1::2, 1::2, 1::2, :],
    ]
    xc = jnp.concatenate(parts, axis=-1).reshape(B, -1, 8 * C)
    y = jnp.einsum("blc,cd->bld", xc, w_reduction)
    mean = jnp.mean(y, axis=-1, keepdims=True)
    var = jnp.mean((y - mean) ** 2, axis=-1, keepdims=True)
    return (y - mean) / jnp.sqrt(var + LN_EPS) * ln_gamma + ln_beta


if __name__ == "__main__":
    # Small shapes consistent with the module; dim=64 so 2C = 128 (lane-dense
    # output, the realistic Swin regime).
    B = 2
    dim = 64
    Z, H, W = 4, 8, 8
    L = Z * H * W

    key = jax.random.PRNGKey(0)
    kx, kw, kg, kb = jax.random.split(key, 4)
    x = jax.random.normal(kx, (B, L, dim), dtype=jnp.float32)

    # nn.Linear(8*dim, 2*dim, bias=False): weight (2C, 8C); pass pre-transposed (8C, 2C).
    w_reduction = (jax.random.normal(kw, (8 * dim, 2 * dim), dtype=jnp.float32)
                   * (1.0 / jnp.sqrt(8.0 * dim)))
    # nn.LayerNorm(2*dim) learnable params (randomized to exercise the affine path).
    ln_gamma = 1.0 + 0.1 * jax.random.normal(kg, (2 * dim,), dtype=jnp.float32)
    ln_beta = 0.1 * jax.random.normal(kb, (2 * dim,), dtype=jnp.float32)

    ref = reference_forward(x, w_reduction, ln_gamma, ln_beta, (Z, H, W))

    # f32 activation path (f32 DMA, one in-VMEM bf16 cast per step).
    out = patch_merging_forward(
        x, w_reduction, ln_gamma, ln_beta, input_resolution=(Z, H, W))
    out = jax.block_until_ready(out)
    assert out.shape == (B, (Z // 2) * (H // 2) * (W // 2), 2 * dim), out.shape
    assert out.dtype == x.dtype
    max_err = float(jnp.max(jnp.abs(out - ref)))
    # bf16 MXU inputs with f32 accumulation -> slightly looser tolerance than fp32.
    assert jnp.allclose(out, ref, atol=5e-2, rtol=5e-2), max_err

    # bf16 activation path (producer already hands bf16): bf16 DMA in and out.
    xb = x.astype(jnp.bfloat16)
    out_b = patch_merging_forward(
        xb, w_reduction, ln_gamma, ln_beta, input_resolution=(Z, H, W))
    out_b = jax.block_until_ready(out_b)
    assert out_b.dtype == jnp.bfloat16
    max_err_b = float(jnp.max(jnp.abs(out_b.astype(jnp.float32) - ref)))
    assert jnp.allclose(out_b.astype(jnp.float32), ref, atol=1.5e-1, rtol=1.5e-1), max_err_b

    print("KERNEL_OK")
</pallas_src>

<mosaic_0001>
module attributes {stable_mosaic.version = 11 : i64} {
  func.func @_merge_reduce_norm_kernel(%arg0: i32, %arg1: i32, %arg2: memref<1x2x4x2x4x128xf32, #tpu.memory_space<vmem>>, %arg3: memref<4x128x128xbf16, #tpu.memory_space<vmem>>, %arg4: memref<1x128xf32, #tpu.memory_space<vmem>>, %arg5: memref<1x128xf32, #tpu.memory_space<vmem>>, %arg6: memref<1x16x128xf32, #tpu.memory_space<vmem>>) attributes {dimension_semantics = [#tpu.dimension_semantics<parallel>, #tpu.dimension_semantics<parallel>], iteration_bounds = array<i64: 4, 1>, scalar_prefetch = 0 : i64, scratch_operands = 0 : i64, tpu.core_type = #tpu.core_type<tc>, window_params = [{transform_indices = @transform_0, window_bounds = array<i64: 1, 2, 4, 2, 4, 128>}, {pipeline_mode = #tpu.pipeline_mode<synchronous>, transform_indices = @transform_1, window_bounds = array<i64: 4, 128, 128>}, {pipeline_mode = #tpu.pipeline_mode<synchronous>, transform_indices = @transform_2, window_bounds = array<i64: 1, 128>}, {pipeline_mode = #tpu.pipeline_mode<synchronous>, transform_indices = @transform_3, window_bounds = array<i64: 1, 128>}, {transform_indices = @transform_4, window_bounds = array<i64: 1, 16, 128>}]} {
    %c0 = arith.constant 0 : index
    %c0_0 = arith.constant 0 : index
    %c0_1 = arith.constant 0 : index
    %c0_2 = arith.constant 0 : index
    %c0_3 = arith.constant 0 : index
    %c0_4 = arith.constant 0 : index
    %0 = vector.load %arg2[%c0, %c0_0, %c0_1, %c0_2, %c0_3, %c0_4] : memref<1x2x4x2x4x128xf32, #tpu.memory_space<vmem>>, vector<1x2x4x2x4x128xf32>
    %1 = arith.truncf %0 : vector<1x2x4x2x4x128xf32> to vector<1x2x4x2x4x128xbf16>
    %cst = arith.constant 0.000000e+00 : f32
    %2 = vector.broadcast %cst : f32 to vector<16x128xf32>
    %3 = vector.extract_strided_slice %1 {offsets = [0, 0, 0, 0, 0, 0], sizes = [1, 1, 4, 1, 4, 128], strides = [1, 1, 1, 1, 1, 1]} : vector<1x2x4x2x4x128xbf16> to vector<1x1x4x1x4x128xbf16>
    %4 = vector.shape_cast %3 : vector<1x1x4x1x4x128xbf16> to vector<1x4x4x128xbf16>
    %5 = vector.shape_cast %4 : vector<1x4x4x128xbf16> to vector<16x128xbf16>
    %c0_5 = arith.constant 0 : index
    %c0_6 = arith.constant 0 : index
    %c0_7 = arith.constant 0 : index
    %6 = vector.load %arg3[%c0_5, %c0_6, %c0_7] : memref<4x128x128xbf16, #tpu.memory_space<vmem>>, vector<1x128x128xbf16>
    %7 = vector.shape_cast %6 : vector<1x128x128xbf16> to vector<128x128xbf16>
    %cst_8 = arith.constant dense<0.000000e+00> : vector<16x128xf32>
    %8 = tpu.matmul %5, %7, %cst_8 {dimension_numbers = #tpu.dot_dimension_numbers<[1], [0], [0], [1], [0, 0, 1, 1], [], []>} : vector<16x128xbf16>, vector<128x128xbf16>, vector<16x128xf32> -> vector<16x128xf32>
    %9 = arith.addf %2, %8 : vector<16x128xf32>
    %10 = vector.extract_strided_slice %1 {offsets = [0, 1, 0, 0, 0, 0], sizes = [1, 1, 4, 1, 4, 128], strides = [1, 1, 1, 1, 1, 1]} : vector<1x2x4x2x4x128xbf16> to vector<1x1x4x1x4x128xbf16>
    %11 = vector.shape_cast %10 : vector<1x1x4x1x4x128xbf16> to vector<1x4x4x128xbf16>
    %12 = vector.shape_cast %11 : vector<1x4x4x128xbf16> to vector<16x128xbf16>
    %c1 = arith.constant 1 : index
    %c0_9 = arith.constant 0 : index
    %c0_10 = arith.constant 0 : index
    %13 = vector.load %arg3[%c1, %c0_9, %c0_10] : memref<4x128x128xbf16, #tpu.memory_space<vmem>>, vector<1x128x128xbf16>
    %14 = vector.shape_cast %13 : vector<1x128x128xbf16> to vector<128x128xbf16>
    %cst_11 = arith.constant dense<0.000000e+00> : vector<16x128xf32>
    %15 = tpu.matmul %12, %14, %cst_11 {dimension_numbers = #tpu.dot_dimension_numbers<[1], [0], [0], [1], [0, 0, 1, 1], [], []>} : vector<16x128xbf16>, vector<128x128xbf16>, vector<16x128xf32> -> vector<16x128xf32>
    %16 = arith.addf %9, %15 : vector<16x128xf32>
    %17 = vector.extract_strided_slice %1 {offsets = [0, 0, 0, 1, 0, 0], sizes = [1, 1, 4, 1, 4, 128], strides = [1, 1, 1, 1, 1, 1]} : vector<1x2x4x2x4x128xbf16> to vector<1x1x4x1x4x128xbf16>
    %18 = vector.shape_cast %17 : vector<1x1x4x1x4x128xbf16> to vector<1x4x4x128xbf16>
    %19 = vector.shape_cast %18 : vector<1x4x4x128xbf16> to vector<16x128xbf16>
    %c2 = arith.constant 2 : index
    %c0_12 = arith.constant 0 : index
    %c0_13 = arith.constant 0 : index
    %20 = vector.load %arg3[%c2, %c0_12, %c0_13] : memref<4x128x128xbf16, #tpu.memory_space<vmem>>, vector<1x128x128xbf16>
    %21 = vector.shape_cast %20 : vector<1x128x128xbf16> to vector<128x128xbf16>
    %cst_14 = arith.constant dense<0.000000e+00> : vector<16x128xf32>
    %22 = tpu.matmul %19, %21, %cst_14 {dimension_numbers = #tpu.dot_dimension_numbers<[1], [0], [0], [1], [0, 0, 1, 1], [], []>} : vector<16x128xbf16>, vector<128x128xbf16>, vector<16x128xf32> -> vector<16x128xf32>
    %23 = arith.addf %16, %22 : vector<16x128xf32>
    %24 = vector.extract_strided_slice %1 {offsets = [0, 1, 0, 1, 0, 0], sizes = [1, 1, 4, 1, 4, 128], strides = [1, 1, 1, 1, 1, 1]} : vector<1x2x4x2x4x128xbf16> to vector<1x1x4x1x4x128xbf16>
    %25 = vector.shape_cast %24 : vector<1x1x4x1x4x128xbf16> to vector<1x4x4x128xbf16>
    %26 = vector.shape_cast %25 : vector<1x4x4x128xbf16> to vector<16x128xbf16>
    %c3 = arith.constant 3 : index
    %c0_15 = arith.constant 0 : index
    %c0_16 = arith.constant 0 : index
    %27 = vector.load %arg3[%c3, %c0_15, %c0_16] : memref<4x128x128xbf16, #tpu.memory_space<vmem>>, vector<1x128x128xbf16>
    %28 = vector.shape_cast %27 : vector<1x128x128xbf16> to vector<128x128xbf16>
    %cst_17 = arith.constant dense<0.000000e+00> : vector<16x128xf32>
    %29 = tpu.matmul %26, %28, %cst_17 {dimension_numbers = #tpu.dot_dimension_numbers<[1], [0], [0], [1], [0, 0, 1, 1], [], []>} : vector<16x128xbf16>, vector<128x128xbf16>, vector<16x128xf32> -> vector<16x128xf32>
    %30 = arith.addf %23, %29 : vector<16x128xf32>
    %cst_18 = arith.constant dense<0.000000e+00> : vector<16xf32>
    %31 = vector.multi_reduction <add>, %30, %cst_18 [1] : vector<16x128xf32> to vector<16xf32>
    %32 = vector.shape_cast %31 : vector<16xf32> to vector<16x1xf32>
    %cst_19 = arith.constant 1.280000e+02 : f32
    %33 = vector.broadcast %cst_19 : f32 to vector<16x1xf32>
    %34 = arith.divf %32, %33 : vector<16x1xf32>
    %35 = vector.broadcast %34 : vector<16x1xf32> to vector<16x128xf32>
    %36 = arith.subf %30, %35 : vector<16x128xf32>
    %37 = arith.mulf %36, %36 : vector<16x128xf32>
    %cst_20 = arith.constant dense<0.000000e+00> : vector<16xf32>
    %38 = vector.multi_reduction <add>, %37, %cst_20 [1] : vector<16x128xf32> to vector<16xf32>
    %39 = vector.shape_cast %38 : vector<16xf32> to vector<16x1xf32>
    %cst_21 = arith.constant 1.280000e+02 : f32
    %40 = vector.broadcast %cst_21 : f32 to vector<16x1xf32>
    %41 = arith.divf %39, %40 : vector<16x1xf32>
    %cst_22 = arith.constant 9.99999974E-6 : f32
    %42 = vector.broadcast %cst_22 : f32 to vector<16x1xf32>
    %43 = arith.addf %41, %42 : vector<16x1xf32>
    %44 = math.rsqrt %43 : vector<16x1xf32>
    %45 = vector.broadcast %44 : vector<16x1xf32> to vector<16x128xf32>
    %46 = arith.mulf %36, %45 : vector<16x128xf32>
    %c0_23 = arith.constant 0 : index
    %c0_24 = arith.constant 0 : index
    %47 = vector.load %arg4[%c0_23, %c0_24] : memref<1x128xf32, #tpu.memory_space<vmem>>, vector<1x128xf32>
    %48 = vector.broadcast %47 : vector<1x128xf32> to vector<16x128xf32>
    %49 = arith.mulf %46, %48 : vector<16x128xf32>
    %c0_25 = arith.constant 0 : index
    %c0_26 = arith.constant 0 : index
    %50 = vector.load %arg5[%c0_25, %c0_26] : memref<1x128xf32, #tpu.memory_space<vmem>>, vector<1x128xf32>
    %51 = vector.broadcast %50 : vector<1x128xf32> to vector<16x128xf32>
    %52 = arith.addf %49, %51 : vector<16x128xf32>
    %53 = vector.shape_cast %52 : vector<16x128xf32> to vector<1x16x128xf32>
    %c0_27 = arith.constant 0 : index
    %c0_28 = arith.constant 0 : index
    %c0_29 = arith.constant 0 : index
    %54 = vector.load %arg6[%c0_27, %c0_28, %c0_29] : memref<1x16x128xf32, #tpu.memory_space<vmem>>, vector<1x16x128xf32>
    tpu.vector_store %arg6[%c0_27, %c0_28, %c0_29], %53 {strides = array<i32>} : memref<1x16x128xf32, #tpu.memory_space<vmem>>, vector<1x16x128xf32>,
    return
  }
  func.func @transform_0(%arg0: i32, %arg1: i32) -> (i32, i32, i32, i32, i32, i32) {
    %c0_i32 = arith.constant 0 : i32
    %c0_i32_0 = arith.constant 0 : i32
    %c0_i32_1 = arith.constant 0 : i32
    %c0_i32_2 = arith.constant 0 : i32
    %c0_i32_3 = arith.constant 0 : i32
    return %arg0, %c0_i32, %arg1, %c0_i32_0, %c0_i32_1, %c0_i32_2 : i32, i32, i32, i32, i32, i32
  }
  func.func @transform_1(%arg0: i32, %arg1: i32) -> (i32, i32, i32) {
    %c0_i32 = arith.constant 0 : i32
    %c0_i32_0 = arith.constant 0 : i32
    %c0_i32_1 = arith.constant 0 : i32
    %c0_i32_2 = arith.constant 0 : i32
    return %c0_i32, %c0_i32_0, %c0_i32_1 : i32, i32, i32
  }
  func.func @transform_2(%arg0: i32, %arg1: i32) -> (i32, i32) {
    %c0_i32 = arith.constant 0 : i32
    %c0_i32_0 = arith.constant 0 : i32
    %c0_i32_1 = arith.constant 0 : i32
    return %c0_i32, %c0_i32_0 : i32, i32
  }
  func.func @transform_3(%arg0: i32, %arg1: i32) -> (i32, i32) {
    %c0_i32 = arith.constant 0 : i32
    %c0_i32_0 = arith.constant 0 : i32
    %c0_i32_1 = arith.constant 0 : i32
    return %c0_i32, %c0_i32_0 : i32, i32
  }
  func.func @transform_4(%arg0: i32, %arg1: i32) -> (i32, i32, i32) {
    %c0_i32 = arith.constant 0 : i32
    %c0_i32_0 = arith.constant 0 : i32
    return %arg0, %arg1, %c0_i32 : i32, i32, i32
  }
}

</mosaic_0001>

<llo_original>
// kernel: patch_merging_forward.1
$region0: #{patch_merging_forward.1}
  #allocation0 [shape = 'u32[]', space=smem, size = 0x4, offset = 0x4, fixed_abs, tag = 'smem constant byte address 0x4 - core index']
  #allocation1 [shape = 'u32[72,128]{1,0:T(1,128)}', space=vmem, size = 0x9000, scoped, tag = 'internal scratch']
  %s0 = inlined_call_operand.vmem [shape: f32[4,2,4,2,4,128], index: 0, kind: input, shape index: {}]
  %s1 = inlined_call_operand.vmem [shape: bf16[4,128,128], index: 1, kind: input, shape index: {}]
  %s2 = inlined_call_operand.vmem [shape: f32[1,128], index: 2, kind: input, shape index: {}]
  %s3 = inlined_call_operand.vmem [shape: f32[1,128], index: 3, kind: input, shape index: {}]
  %s4 = inlined_call_operand.hbm [shape: f32[4,16,128], index: 4, kind: output, shape index: {}]
  %s5 = sld [smem:[#allocation0]]
  $region49: #{patch_merging_forward.1} parent=0
    _
  %s7 = ssub.s32 1, %s5
  %s8 = scalar_select 0, %s7, %s5
  $region1: #{patch_merging_forward.1} parent=0
    #allocation2 [shape = 'u8[16384]{0}', space=vmem, size = 0x4000, scoped, tag = 'output window, operand 0']
    #allocation3 [shape = 's32[2]{0}', space=sflag, size = 0x8, scoped, tag = 'scoped memory for patch_merging_forward.1']
    %9 = vsyncpa [#allocation3], 0
    %s10 = scalar_lea.sflag [#allocation3], 1
    %11 = vsyncpa %s10, 0
    loop: start=0, step=1, limit=6
    $region2: #{patch_merging_forward.1} parent=1 // loop_pre_header
      _
    $region3: #{patch_merging_forward.1} parent=1 // loop_header
      %s13 = sphi 0, %s17
      %p14 = scmp.ge.s32.totalorder %s13, 6
      %s20 = sphi 0, %s32
      %s21 = sphi 0, %s28
      %s22 = sphi 0, %s20
      %s23 = sphi 0, %s21
      %s24 = sphi 0, %s22
      %s25 = sphi 0, %s23
      %s37 = sphi 0, %s39
      %s40 = sphi 0, %s37
      %s41 = sphi 0, %s40
      %s57 = sphi 0, %s41
      %s61 = sphi 0, %s61
      %s63 = sphi 0, %s61
      %s64 = sphi 0, %s63
      %s78 = sphi 0, %s64
      %s82 = sphi 0, %s82
      %s84 = sphi 0, %s82
      %s85 = sphi 0, %s84
      %s99 = sphi 0, %s85
      %s103 = sphi 0, %s103
      %s105 = sphi 0, %s103
      %s106 = sphi 0, %s105
      %s120 = sphi 0, %s106
      %s128 = sphi 0, %s130
      %s131 = sphi 0, %s128
      %s132 = sphi 0, %s131
      %s148 = sphi 0, %s132
    $region4: #{patch_merging_forward.1} parent=1 // loop_header_branch
      %16 = sbr.rel (%p14) target = $region8
    $region5: #{patch_merging_forward.1} parent=1 // loop_body
      %s18 = ssub.s32 %s13, 1
      %s19 = ssub.s32 %s13, 2
      %s26 = sadd.s32 1, %s21
      %p27 = scmp.ge.s32.totalorder %s26, 1
      %s28 = scalar_select %p27, 0, %s26
      %s29 = sadd.s32 1, %s20
      %s30 = scalar_select %p27, %s29, %s20
      %p31 = scmp.ge.s32.totalorder %s30, 4
      %s32 = scalar_select %p31, 0, %s30
      %s33 = ssub.s32 %s20, %s32
      %s34 = ssub.s32 %s21, %s28
      %s35 = sor.u32 %s33, %s34
      %p36 = scmp.eq.s32.totalorder %s35, 0
      %s38 = sadd.s32 %s37, 1
      %s39 = scalar_select %p36, %s37, %s38
      %p42 = pneg %p36
      %p43 = scmp.eq.s32.totalorder %s13, 3
      %p44 = por %p42, %p43
      %p45 = scmp.ne.s32.totalorder %s37, %s40
      %p46 = scmp.eq.s32.totalorder %s13, 0
      %p47 = por %p45, %p46
      %p48 = scmp.ne.s32.totalorder %s37, %s40
      %p49 = scmp.eq.s32.totalorder %s18, 3
      %p50 = por %p48, %p49
      %p51 = scmp.ne.s32.totalorder %s40, %s41
      %p52 = scmp.eq.s32.totalorder %s18, 0
      %p53 = por %p51, %p52
      %p54 = scmp.ne.s32.totalorder %s40, %s41
      %p55 = scmp.eq.s32.totalorder %s19, 3
      %p56 = por %p54, %p55
      %p58 = scmp.ne.s32.totalorder %s41, %s57
      %p59 = scmp.eq.s32.totalorder %s19, 0
      %p60 = por %p58, %p59
      %s62 = sadd.s32 %s61, 1
      %p65 = scmp.eq.s32.totalorder %s13, 3
      %p66 = scmp.ne.s32.totalorder %s61, %s63
      %p67 = scmp.eq.s32.totalorder %s13, 0
      %p68 = por %p66, %p67
      %p69 = scmp.ne.s32.totalorder %s61, %s63
      %p70 = scmp.eq.s32.totalorder %s18, 3
      %p71 = por %p69, %p70
      %p72 = scmp.ne.s32.totalorder %s63, %s64
      %p73 = scmp.eq.s32.totalorder %s18, 0
      %p74 = por %p72, %p73
      %p75 = scmp.ne.s32.totalorder %s63, %s64
      %p76 = scmp.eq.s32.totalorder %s19, 3
      %p77 = por %p75, %p76
      %p79 = scmp.ne.s32.totalorder %s64, %s78
      %p80 = scmp.eq.s32.totalorder %s19, 0
      %p81 = por %p79, %p80
      %s83 = sadd.s32 %s82, 1
      %p86 = scmp.eq.s32.totalorder %s13, 3
      %p87 = scmp.ne.s32.totalorder %s82, %s84
      %p88 = scmp.eq.s32.totalorder %s13, 0
      %p89 = por %p87, %p88
      %p90 = scmp.ne.s32.totalorder %s82, %s84
      %p91 = scmp.eq.s32.totalorder %s18, 3
      %p92 = por %p90, %p91
      %p93 = scmp.ne.s32.totalorder %s84, %s85
      %p94 = scmp.eq.s32.totalorder %s18, 0
      %p95 = por %p93, %p94
      %p96 = scmp.ne.s32.totalorder %s84, %s85
      %p97 = scmp.eq.s32.totalorder %s19, 3
      %p98 = por %p96, %p97
      %p100 = scmp.ne.s32.totalorder %s85, %s99
      %p101 = scmp.eq.s32.totalorder %s19, 0
      %p102 = por %p100, %p101
      %s104 = sadd.s32 %s103, 1
      %p107 = scmp.eq.s32.totalorder %s13, 3
      %p108 = scmp.ne.s32.totalorder %s103, %s105
      %p109 = scmp.eq.s32.totalorder %s13, 0
      %p110 = por %p108, %p109
      %p111 = scmp.ne.s32.totalorder %s103, %s105
      %p112 = scmp.eq.s32.totalorder %s18, 3
      %p113 = por %p111, %p112
      %p114 = scmp.ne.s32.totalorder %s105, %s106
      %p115 = scmp.eq.s32.totalorder %s18, 0
      %p116 = por %p114, %p115
      %p117 = scmp.ne.s32.totalorder %s105, %s106
      %p118 = scmp.eq.s32.totalorder %s19, 3
      %p119 = por %p117, %p118
      %p121 = scmp.ne.s32.totalorder %s106, %s120
      %p122 = scmp.eq.s32.totalorder %s19, 0
      %p123 = por %p121, %p122
      %s124 = ssub.s32 %s20, %s32
      %s125 = ssub.s32 %s21, %s28
      %s126 = sor.u32 %s124, %s125
      %p127 = scmp.eq.s32.totalorder %s126, 0
      %s129 = sadd.s32 %s128, 1
      %s130 = scalar_select %p127, %s128, %s129
      %p133 = pneg %p127
      %p134 = scmp.eq.s32.totalorder %s13, 3
      %p135 = por %p133, %p134
      %p136 = scmp.ne.s32.totalorder %s128, %s131
      %p137 = scmp.eq.s32.totalorder %s13, 0
      %p138 = por %p136, %p137
      %p139 = scmp.ne.s32.totalorder %s128, %s131
      %p140 = scmp.eq.s32.totalorder %s18, 3
      %p141 = por %p139, %p140
      %p142 = scmp.ne.s32.totalorder %s131, %s132
      %p143 = scmp.eq.s32.totalorder %s18, 0
      %p144 = por %p142, %p143
      %p145 = scmp.ne.s32.totalorder %s131, %s132
      %p146 = scmp.eq.s32.totalorder %s19, 3
      %p147 = por %p145, %p146
      %p149 = scmp.ne.s32.totalorder %s132, %s148
      %p150 = scmp.eq.s32.totalorder %s19, 0
      %p151 = por %p149, %p150
      %p152 = scmp.le.s32.totalorder 1, %s13
      %p153 = scmp.lt.s32.totalorder %s13, 5
      %p154 = pnand %p152, %p153
      %p155 = pneg %p154
      // Predicated region
      $region9: #{patch_merging_forward.1} parent=5 // pred_check
        _
      $region10: #{patch_merging_forward.1} parent=5 // pred_check_branch
        %157 = sbr.rel (%p154) target = $region12
      $region11: #{patch_merging_forward.1} parent=5 // pred_region
        %s158 = ssub.s32 %s13, 1
        // Predicated region
        $region13: #{patch_merging_forward.1} parent=11 // pred_check
          %p159 = pneg %p74
        $region14: #{patch_merging_forward.1} parent=11 // pred_check_branch
          %161 = sbr.rel (%p159) target = $region16
        $region15: #{patch_merging_forward.1} parent=11 // pred_region
          _
        $region16: #{patch_merging_forward.1} parent=11 // pred_fallthru
          _
        // Predicated region
        $region17: #{patch_merging_forward.1} parent=11 // pred_check
          %p162 = pneg %p95
        $region18: #{patch_merging_forward.1} parent=11 // pred_check_branch
          %164 = sbr.rel (%p162) target = $region20
        $region19: #{patch_merging_forward.1} parent=11 // pred_region
          _
        $region20: #{patch_merging_forward.1} parent=11 // pred_fallthru
          _
        // Predicated region
        $region21: #{patch_merging_forward.1} parent=11 // pred_check
          %p165 = pneg %p116
        $region22: #{patch_merging_forward.1} parent=11 // pred_check_branch
          %167 = sbr.rel (%p165) target = $region24
        $region23: #{patch_merging_forward.1} parent=11 // pred_region
          _
        $region24: #{patch_merging_forward.1} parent=11 // pred_fallthru
          _
      $region12: #{patch_merging_forward.1} parent=5 // pred_fallthru
        _
      %p168 = scmp.lt.s32.totalorder %s13, 4
      // Predicated region
      $region25: #{patch_merging_forward.1} parent=5 // pred_check
        %p169 = pneg %p168
      $region26: #{patch_merging_forward.1} parent=5 // pred_check_branch
        %171 = sbr.rel (%p169) target = $region28
      $region27: #{patch_merging_forward.1} parent=5 // pred_region
        // Predicated region
        $region29: #{patch_merging_forward.1} parent=27 // pred_check
          %p172 = pneg %p47
        $region30: #{patch_merging_forward.1} parent=27 // pred_check_branch
          %174 = sbr.rel (%p172) target = $region32
        $region31: #{patch_merging_forward.1} parent=27 // pred_region
          %s175 = smul.u32 4, %s21
          %p176 = scmp.lt.s32.totalorder %s20, 3
          %s177 = scalar_select %p176, %s20, 3
          %p178 = scmp.lt.s32.totalorder %s175, 3
          %s179 = scalar_select %p178, %s175, 3
          %s180 = smul.addr %s179, 2
          %s181 = smul.addr %s177, 16
          %s182 = sadd.s32 %s180, %s181
          %s183 = smul.addr %s182, 4
          %s184 = scalar_lea.vmem %s0, %s183
          %s185 = smul.u32 4, %s21
        $region32: #{patch_merging_forward.1} parent=27 // pred_fallthru
          _
      $region28: #{patch_merging_forward.1} parent=5 // pred_fallthru
        _
      %p186 = scmp.le.s32.totalorder 1, %s13
      %p187 = scmp.lt.s32.totalorder %s13, 5
      %p188 = pnand %p186, %p187
      %p189 = pneg %p188
      // Predicated region
      $region33: #{patch_merging_forward.1} parent=5 // pred_check
        _
      $region34: #{patch_merging_forward.1} parent=5 // pred_check_branch
        %191 = sbr.rel (%p188) target = $region36
      $region35: #{patch_merging_forward.1} parent=5 // pred_region
        %s192 = ssub.s32 %s13, 1
        %s193 = smul.u32 4, %s23
        %p194 = scmp.lt.s32.totalorder %s22, 3
        %s195 = scalar_select %p194, %s22, 3
        %p196 = scmp.lt.s32.totalorder %s193, 3
        %s197 = scalar_select %p196, %s193, 3
        %s198 = smul.addr %s197, 2
        %s199 = smul.addr %s195, 16
        %s200 = sadd.s32 %s198, %s199
        %s201 = smul.addr %s200, 4
        %s202 = scalar_lea.vmem %s0, %s201
        %p203 = pneg %p53
        %p204 = pneg %p50
        %p205 = pneg %p74
        %p206 = pneg %p71
        %p207 = pneg %p95
        %p208 = pneg %p92
        %p209 = pneg %p116
        %p210 = pneg %p113
        %p211 = pneg %p144
        %p212 = pneg %p141
        %s213 = sand.u32 %s131, 1
        %s214 = scalar_lea.sflag [#allocation3], %s213
        %s215 = sand.u32 %s131, 1
        %s216 = smul.addr %s215, 16
        %s217 = scalar_lea.vmem [#allocation2], %s216
        %s218 = smul.u32 4, %s23
        %p219 = scmp.lt.s32.totalorder %s22, 3
        %s220 = scalar_select %p219, %s22, 3
        %p221 = scmp.lt.s32.totalorder %s218, 3
        %s222 = scalar_select %p221, %s218, 3
        %s223 = smul.addr %s222, 2
        %s224 = smul.addr %s220, 16
        %s225 = sadd.s32 %s223, %s224
        %s226 = smul.addr %s225, 4
        %s227 = scalar_lea.vmem %s0, %s226
        %s228 = smul.u32 4, %s23
        %s229 = smul.u32 2, %s23
        %v230 = vld [vmem:[%s227] sm:$0xf]
        %v231 = vld [vmem:[%s227 + $0x4] sm:$0xf]
        %v232 = vld [vmem:[%s227 + $0x8] sm:$0xf]
        %v233 = vld [vmem:[%s227 + $0xc] sm:$0xf]
        %v234 = vld [vmem:[%s227 + $0x10] sm:$0xf]
        %v235 = vld [vmem:[%s227 + $0x14] sm:$0xf]
        %v236 = vld [vmem:[%s227 + $0x18] sm:$0xf]
        %v237 = vld [vmem:[%s227 + $0x1c] sm:$0xf]
        %v238 = vld [vmem:[%s227 + $0x20] sm:$0xf]
        %v239 = vld [vmem:[%s227 + $0x24] sm:$0xf]
        %v240 = vld [vmem:[%s227 + $0x28] sm:$0xf]
        %v241 = vld [vmem:[%s227 + $0x2c] sm:$0xf]
        %v242 = vld [vmem:[%s227 + $0x30] sm:$0xf]
        %v243 = vld [vmem:[%s227 + $0x34] sm:$0xf]
        %v244 = vld [vmem:[%s227 + $0x38] sm:$0xf]
        %v245 = vld [vmem:[%s227 + $0x3c] sm:$0xf]
        %v246 = vpack.c.bf16 %v230, %v230
        %v247 = vpack.c.bf16 %v231, %v231
        %v248 = vpack.c.bf16 %v232, %v232
        %v249 = vpack.c.bf16 %v233, %v233
        %v250 = vpack.c.bf16 %v234, %v234
        %v251 = vpack.c.bf16 %v235, %v235
        %v252 = vpack.c.bf16 %v236, %v236
        %v253 = vpack.c.bf16 %v237, %v237
        %v254 = vpack.c.bf16 %v238, %v238
        %v255 = vpack.c.bf16 %v239, %v239
        %v256 = vpack.c.bf16 %v240, %v240
        %v257 = vpack.c.bf16 %v241, %v241
        %v258 = vpack.c.bf16 %v242, %v242
        %v259 = vpack.c.bf16 %v243, %v243
        %v260 = vpack.c.bf16 %v244, %v244
        %v261 = vpack.c.bf16 %v245, %v245
        %v262 = vld [vmem:[%s1] sm:$0xf]
        %v263 = vld [vmem:[%s1 + $0x4] sm:$0xf]
        %v264 = vld [vmem:[%s1 + $0x8] sm:$0xf]
        %v265 = vld [vmem:[%s1 + $0xc] sm:$0xf]
        %v266 = vld [vmem:[%s1 + $0x10] sm:$0xf]
        %v267 = vld [vmem:[%s1 + $0x14] sm:$0xf]
        %v268 = vld [vmem:[%s1 + $0x18] sm:$0xf]
        %v269 = vld [vmem:[%s1 + $0x1c] sm:$0xf]
        %v270 = vld [vmem:[%s1 + $0x20] sm:$0xf]
        %v271 = vld [vmem:[%s1 + $0x24] sm:$0xf]
        %v272 = vld [vmem:[%s1 + $0x28] sm:$0xf]
        %v273 = vld [vmem:[%s1 + $0x2c] sm:$0xf]
        %v274 = vld [vmem:[%s1 + $0x30] sm:$0xf]
        %v275 = vld [vmem:[%s1 + $0x34] sm:$0xf]
        %v276 = vld [vmem:[%s1 + $0x38] sm:$0xf]
        %v277 = vld [vmem:[%s1 + $0x3c] sm:$0xf]
        %s278 = scalar_lea.vmem %s1, 64
        %v279 = vld [vmem:[%s278] sm:$0xf]
        %v280 = vld [vmem:[%s278 + $0x4] sm:$0xf]
        %v281 = vld [vmem:[%s278 + $0x8] sm:$0xf]
        %v282 = vld [vmem:[%s278 + $0xc] sm:$0xf]
        %v283 = vld [vmem:[%s278 + $0x10] sm:$0xf]
        %v284 = vld [vmem:[%s278 + $0x14] sm:$0xf]
        %v285 = vld [vmem:[%s278 + $0x18] sm:$0xf]
        %v286 = vld [vmem:[%s278 + $0x1c] sm:$0xf]
        %v287 = vld [vmem:[%s278 + $0x20] sm:$0xf]
        %v288 = vld [vmem:[%s278 + $0x24] sm:$0xf]
        %v289 = vld [vmem:[%s278 + $0x28] sm:$0xf]
        %v290 = vld [vmem:[%s278 + $0x2c] sm:$0xf]
        %v291 = vld [vmem:[%s278 + $0x30] sm:$0xf]
        %v292 = vld [vmem:[%s278 + $0x34] sm:$0xf]
        %v293 = vld [vmem:[%s278 + $0x38] sm:$0xf]
        %v294 = vld [vmem:[%s278 + $0x3c] sm:$0xf]
        %296 = vst [vmem:[#allocation1] ss:$4 sm:$0xff] %v254
        %s298 = scalar_lea.vmem [#allocation1], 1
        %299 = vst [vmem:[%s298] ss:$4 sm:$0xff] %v256
        %s301 = scalar_lea.vmem [#allocation1], 2
        %302 = vst [vmem:[%s301] ss:$4 sm:$0xff] %v258
        %s304 = scalar_lea.vmem [#allocation1], 3
        %305 = vst [vmem:[%s304] ss:$4 sm:$0xff] %v260
        %v306 = vld.sshfl [vmem:[#allocation1] sm:$0xff pattern:$0x73625140]
        %v324 = vunpack.c.l.b16 %v279
        %v325 = vunpack.c.l.b16 %v280
        %v326 = vunpack.c.l.b16 %v281
        %v327 = vunpack.c.l.b16 %v282
        %v328 = vunpack.c.l.b16 %v283
        %v329 = vunpack.c.l.b16 %v284
        %v330 = vunpack.c.l.b16 %v285
        %v331 = vunpack.c.l.b16 %v286
        %v332 = vunpack.c.l.b16 %v287
        %v333 = vunpack.c.l.b16 %v288
        %v334 = vunpack.c.l.b16 %v289
        %v335 = vunpack.c.l.b16 %v290
        %v336 = vunpack.c.l.b16 %v291
        %v337 = vunpack.c.l.b16 %v292
        %v338 = vunpack.c.l.b16 %v293
        %v339 = vunpack.c.l.b16 %v294
        %v340 = vpack.c.b16 %v325, %v324
        %v341 = vpack.c.b16 %v327, %v326
        %v342 = vpack.c.b16 %v329, %v328
        %v343 = vpack.c.b16 %v331, %v330
        %v344 = vpack.c.b16 %v333, %v332
        %v345 = vpack.c.b16 %v335, %v334
        %v346 = vpack.c.b16 %v337, %v336
        %v347 = vpack.c.b16 %v339, %v338
        %356 = vmatpush.bf16.msra.mxu0 %v347
        %357 = vmatpush.bf16.msra.mxu0 %v346
        %358 = vmatpush.bf16.msra.mxu0 %v345
        %359 = vmatpush.bf16.msra.mxu0 %v344
        %360 = vmatpush.bf16.msra.mxu0 %v343
        %361 = vmatpush.bf16.msra.mxu0 %v342
        %362 = vmatpush.bf16.msra.mxu0 %v341
        %363 = vmatpush.bf16.msra.mxu0 %v340
        %364 = vmatmul.bf16.gmra.mxu0 %v306
        %v365 = vpop.f32.mrf.mxu0
        %v366 = vadd.f32 0.0, %v365
        %v367 = vpop.f32.mrf.mxu0
        %v368 = vadd.f32 0.0, %v367
        %369 = vdwg.mxu0
        %371 = vst [vmem:[#allocation1] ss:$4 sm:$0xff] %v246
        %s373 = scalar_lea.vmem [#allocation1], 1
        %374 = vst [vmem:[%s373] ss:$4 sm:$0xff] %v248
        %s376 = scalar_lea.vmem [#allocation1], 2
        %377 = vst [vmem:[%s376] ss:$4 sm:$0xff] %v250
        %s379 = scalar_lea.vmem [#allocation1], 3
        %380 = vst [vmem:[%s379] ss:$4 sm:$0xff] %v252
        %v381 = vld.sshfl [vmem:[#allocation1] sm:$0xff pattern:$0x73625140]
        %v399 = vunpack.c.l.b16 %v262
        %v400 = vunpack.c.l.b16 %v263
        %v401 = vunpack.c.l.b16 %v264
        %v402 = vunpack.c.l.b16 %v265
        %v403 = vunpack.c.l.b16 %v266
        %v404 = vunpack.c.l.b16 %v267
        %v405 = vunpack.c.l.b16 %v268
        %v406 = vunpack.c.l.b16 %v269
        %v407 = vunpack.c.l.b16 %v270
        %v408 = vunpack.c.l.b16 %v271
        %v409 = vunpack.c.l.b16 %v272
        %v410 = vunpack.c.l.b16 %v273
        %v411 = vunpack.c.l.b16 %v274
        %v412 = vunpack.c.l.b16 %v275
        %v413 = vunpack.c.l.b16 %v276
        %v414 = vunpack.c.l.b16 %v277
        %v415 = vpack.c.b16 %v400, %v399
        %v416 = vpack.c.b16 %v402, %v401
        %v417 = vpack.c.b16 %v404, %v403
        %v418 = vpack.c.b16 %v406, %v405
        %v419 = vpack.c.b16 %v408, %v407
        %v420 = vpack.c.b16 %v410, %v409
        %v421 = vpack.c.b16 %v412, %v411
        %v422 = vpack.c.b16 %v414, %v413
        %431 = vmatpush.bf16.msra.mxu0 %v422
        %432 = vmatpush.bf16.msra.mxu0 %v421
        %433 = vmatpush.bf16.msra.mxu0 %v420
        %434 = vmatpush.bf16.msra.mxu0 %v419
        %435 = vmatpush.bf16.msra.mxu0 %v418
        %436 = vmatpush.bf16.msra.mxu0 %v417
        %437 = vmatpush.bf16.msra.mxu0 %v416
        %438 = vmatpush.bf16.msra.mxu0 %v415
        %439 = vmatmul.bf16.gmra.mxu0 %v381
        %v440 = vpop.f32.mrf.mxu0
        %v441 = vadd.f32 %v366, %v440
        %v442 = vpop.f32.mrf.mxu0
        %v443 = vadd.f32 %v368, %v442
        %444 = vdwg.mxu0
        %s445 = scalar_lea.vmem %s1, 128
        %v446 = vld [vmem:[%s445] sm:$0xf]
        %v447 = vld [vmem:[%s445 + $0x4] sm:$0xf]
        %v448 = vld [vmem:[%s445 + $0x8] sm:$0xf]
        %v449 = vld [vmem:[%s445 + $0xc] sm:$0xf]
        %v450 = vld [vmem:[%s445 + $0x10] sm:$0xf]
        %v451 = vld [vmem:[%s445 + $0x14] sm:$0xf]
        %v452 = vld [vmem:[%s445 + $0x18] sm:$0xf]
        %v453 = vld [vmem:[%s445 + $0x1c] sm:$0xf]
        %v454 = vld [vmem:[%s445 + $0x20] sm:$0xf]
        %v455 = vld [vmem:[%s445 + $0x24] sm:$0xf]
        %v456 = vld [vmem:[%s445 + $0x28] sm:$0xf]
        %v457 = vld [vmem:[%s445 + $0x2c] sm:$0xf]
        %v458 = vld [vmem:[%s445 + $0x30] sm:$0xf]
        %v459 = vld [vmem:[%s445 + $0x34] sm:$0xf]
        %v460 = vld [vmem:[%s445 + $0x38] sm:$0xf]
        %v461 = vld [vmem:[%s445 + $0x3c] sm:$0xf]
        %463 = vst [vmem:[#allocation1] ss:$4 sm:$0xff] %v247
        %s465 = scalar_lea.vmem [#allocation1], 1
        %466 = vst [vmem:[%s465] ss:$4 sm:$0xff] %v249
        %s468 = scalar_lea.vmem [#allocation1], 2
        %469 = vst [vmem:[%s468] ss:$4 sm:$0xff] %v251
        %s471 = scalar_lea.vmem [#allocation1], 3
        %472 = vst [vmem:[%s471] ss:$4 sm:$0xff] %v253
        %v473 = vld.sshfl [vmem:[#allocation1] sm:$0xff pattern:$0x73625140]
        %v491 = vunpack.c.l.b16 %v446
        %v492 = vunpack.c.l.b16 %v447
        %v493 = vunpack.c.l.b16 %v448
        %v494 = vunpack.c.l.b16 %v449
        %v495 = vunpack.c.l.b16 %v450
        %v496 = vunpack.c.l.b16 %v451
        %v497 = vunpack.c.l.b16 %v452
        %v498 = vunpack.c.l.b16 %v453
        %v499 = vunpack.c.l.b16 %v454
        %v500 = vunpack.c.l.b16 %v455
        %v501 = vunpack.c.l.b16 %v456
        %v502 = vunpack.c.l.b16 %v457
        %v503 = vunpack.c.l.b16 %v458
        %v504 = vunpack.c.l.b16 %v459
        %v505 = vunpack.c.l.b16 %v460
        %v506 = vunpack.c.l.b16 %v461
        %v507 = vpack.c.b16 %v492, %v491
        %v508 = vpack.c.b16 %v494, %v493
        %v509 = vpack.c.b16 %v496, %v495
        %v510 = vpack.c.b16 %v498, %v497
        %v511 = vpack.c.b16 %v500, %v499
        %v512 = vpack.c.b16 %v502, %v501
        %v513 = vpack.c.b16 %v504, %v503
        %v514 = vpack.c.b16 %v506, %v505
        %523 = vmatpush.bf16.msra.mxu0 %v514
        %524 = vmatpush.bf16.msra.mxu0 %v513
        %525 = vmatpush.bf16.msra.mxu0 %v512
        %526 = vmatpush.bf16.msra.mxu0 %v511
        %527 = vmatpush.bf16.msra.mxu0 %v510
        %528 = vmatpush.bf16.msra.mxu0 %v509
        %529 = vmatpush.bf16.msra.mxu0 %v508
        %530 = vmatpush.bf16.msra.mxu0 %v507
        %531 = vmatmul.bf16.gmra.mxu0 %v473
        %v532 = vpop.f32.mrf.mxu0
        %v533 = vadd.f32 0.0, %v532
        %v534 = vpop.f32.mrf.mxu0
        %v535 = vadd.f32 0.0, %v534
        %536 = vdwg.mxu0
        %v537 = vadd.f32 %v441, %v533
        %v538 = vadd.f32 %v443, %v535
        %s539 = scalar_lea.vmem %s1, 192
        %v540 = vld [vmem:[%s539] sm:$0xf]
        %v541 = vld [vmem:[%s539 + $0x4] sm:$0xf]
        %v542 = vld [vmem:[%s539 + $0x8] sm:$0xf]
        %v543 = vld [vmem:[%s539 + $0xc] sm:$0xf]
        %v544 = vld [vmem:[%s539 + $0x10] sm:$0xf]
        %v545 = vld [vmem:[%s539 + $0x14] sm:$0xf]
        %v546 = vld [vmem:[%s539 + $0x18] sm:$0xf]
        %v547 = vld [vmem:[%s539 + $0x1c] sm:$0xf]
        %v548 = vld [vmem:[%s539 + $0x20] sm:$0xf]
        %v549 = vld [vmem:[%s539 + $0x24] sm:$0xf]
        %v550 = vld [vmem:[%s539 + $0x28] sm:$0xf]
        %v551 = vld [vmem:[%s539 + $0x2c] sm:$0xf]
        %v552 = vld [vmem:[%s539 + $0x30] sm:$0xf]
        %v553 = vld [vmem:[%s539 + $0x34] sm:$0xf]
        %v554 = vld [vmem:[%s539 + $0x38] sm:$0xf]
        %v555 = vld [vmem:[%s539 + $0x3c] sm:$0xf]
        %557 = vst [vmem:[#allocation1] ss:$4 sm:$0xff] %v255
        %s559 = scalar_lea.vmem [#allocation1], 1
        %560 = vst [vmem:[%s559] ss:$4 sm:$0xff] %v257
        %s562 = scalar_lea.vmem [#allocation1], 2
        %563 = vst [vmem:[%s562] ss:$4 sm:$0xff] %v259
        %s565 = scalar_lea.vmem [#allocation1], 3
        %566 = vst [vmem:[%s565] ss:$4 sm:$0xff] %v261
        %v567 = vld.sshfl [vmem:[#allocation1] sm:$0xff pattern:$0x73625140]
        %v585 = vunpack.c.l.b16 %v540
        %v586 = vunpack.c.l.b16 %v541
        %v587 = vunpack.c.l.b16 %v542
        %v588 = vunpack.c.l.b16 %v543
        %v589 = vunpack.c.l.b16 %v544
        %v590 = vunpack.c.l.b16 %v545
        %v591 = vunpack.c.l.b16 %v546
        %v592 = vunpack.c.l.b16 %v547
        %v593 = vunpack.c.l.b16 %v548
        %v594 = vunpack.c.l.b16 %v549
        %v595 = vunpack.c.l.b16 %v550
        %v596 = vunpack.c.l.b16 %v551
        %v597 = vunpack.c.l.b16 %v552
        %v598 = vunpack.c.l.b16 %v553
        %v599 = vunpack.c.l.b16 %v554
        %v600 = vunpack.c.l.b16 %v555
        %v601 = vpack.c.b16 %v586, %v585
        %v602 = vpack.c.b16 %v588, %v587
        %v603 = vpack.c.b16 %v590, %v589
        %v604 = vpack.c.b16 %v592, %v591
        %v605 = vpack.c.b16 %v594, %v593
        %v606 = vpack.c.b16 %v596, %v595
        %v607 = vpack.c.b16 %v598, %v597
        %v608 = vpack.c.b16 %v600, %v599
        %617 = vmatpush.bf16.msra.mxu0 %v608
        %618 = vmatpush.bf16.msra.mxu0 %v607
        %619 = vmatpush.bf16.msra.mxu0 %v606
        %620 = vmatpush.bf16.msra.mxu0 %v605
        %621 = vmatpush.bf16.msra.mxu0 %v604
        %622 = vmatpush.bf16.msra.mxu0 %v603
        %623 = vmatpush.bf16.msra.mxu0 %v602
        %624 = vmatpush.bf16.msra.mxu0 %v601
        %625 = vmatmul.bf16.gmra.mxu0 %v567
        %v626 = vpop.f32.mrf.mxu0
        %v627 = vadd.f32 0.0, %v626
        %v628 = vpop.f32.mrf.mxu0
        %v629 = vadd.f32 0.0, %v628
        %630 = vdwg.mxu0
        %v631 = vadd.f32 %v537, %v627
        %v632 = vadd.f32 %v538, %v629
        %633 = vadd.xlane.f32.xlu0 %v631
        %v634 = vpop.xlane.xlu0 %633
        %635 = vadd.xlane.f32.xlu0 %v632
        %v636 = vpop.xlane.xlu0 %635
        %v637 = vrcp.pop 128.0
        %v638 = vmul.f32 128.0, %v637
        %v639 = vsub.f32 1.0, %v638
        %v640 = vmul.f32 %v637, %v639
        %v641 = vadd.f32 %v637, %v640
        %vm642 = vweird.f32 %v637
        %v643 = vsel %vm642, %v637, %v641
        %v644 = vmul.f32 %v634, %v643
        %v645 = vmul.f32 %v636, %v643
        %v646 = vsub.f32 %v631, %v644
        %v647 = vsub.f32 %v632, %v645
        %v648 = vmul.f32 %v646, %v646
        %v649 = vmul.f32 %v647, %v647
        %650 = vadd.xlane.f32.xlu0 %v648
        %v651 = vpop.xlane.xlu0 %650
        %652 = vadd.xlane.f32.xlu0 %v649
        %v653 = vpop.xlane.xlu0 %652
        %v654 = vmul.f32 %v651, %v643
        %v655 = vmul.f32 %v653, %v643
        %v656 = vadd.f32 %v654, 1e-05
        %v657 = vadd.f32 %v655, 1e-05
        %v658 = vrsqrt.pop %v656
        %v659 = vmul.f32 %v658, %v656
        %v660 = vmul.f32 %v659, %v658
        %v661 = vmul.f32 0.5, %v660
        %v662 = vsub.f32 1.5, %v661
        %v663 = vmul.f32 %v658, %v662
        %vm664 = vweird.f32 %v656
        %vm665 = vweird.f32 %v658
        %vm666 = vmor %vm664, %vm665
        %v667 = vsel %vm666, %v658, %v663
        %v668 = vrsqrt.pop %v657
        %v669 = vmul.f32 %v668, %v657
        %v670 = vmul.f32 %v669, %v668
        %v671 = vmul.f32 0.5, %v670
        %v672 = vsub.f32 1.5, %v671
        %v673 = vmul.f32 %v668, %v672
        %vm674 = vweird.f32 %v657
        %vm675 = vweird.f32 %v668
        %vm676 = vmor %vm674, %vm675
        %v677 = vsel %vm676, %v668, %v673
        %v678 = vmul.f32 %v646, %v667
        %v679 = vmul.f32 %v647, %v677
        %v680 = vld [vmem:[%s2] sm:$0x1]
        %v682 = vperm.slane %v680, 0
        %v684 = vmul.f32 %v678, %v682
        %v685 = vmul.f32 %v679, %v682
        %v686 = vld [vmem:[%s3] sm:$0x1]
        %v688 = vperm.slane %v686, 0
        %v690 = vadd.f32 %v684, %v688
        %v691 = vadd.f32 %v685, %v688
        %692 = vst [vmem:[%s217] sm:$0xff] %v690
        %693 = vst [vmem:[%s217 + $0x8] sm:$0xff] %v691
        %s694 = sand.u32 %s131, 1
        %s695 = scalar_lea.sflag [#allocation3], %s694
        %s696 = sand.u32 %s131, 1
        %s697 = smul.addr %s696, 16
        %s698 = scalar_lea.vmem [#allocation2], %s697
        // Predicated region
        $region37: #{patch_merging_forward.1} parent=35 // pred_check
          %p699 = pneg %p141
        $region38: #{patch_merging_forward.1} parent=35 // pred_check_branch
          %701 = sbr.rel (%p699) target = $region40
        $region39: #{patch_merging_forward.1} parent=35 // pred_region
          %s702 = smul.u32 2, %s23
          %704 = vsyncadd %s695, 0
          %s705 = smul.addr %s22, 2
          %s706 = sadd.s32 %s702, %s705
          %s707 = smul.addr %s706, 8
          %s708 = scalar_lea.hbm %s4, %s707
          %s709 = sshll.u32 %s698, 4
          %s710 = int_to_ptr.vmem [resolvable:$true] %s709
          %s711 = sshll.u32 %s708, 4
          %s712 = int_to_ptr.hbm [resolvable:$true] %s711
          %717 = dma.vmem_to_hbm [thread:$0]  %s710, 256, %s712, %s695, 128, 128, 8
        $region40: #{patch_merging_forward.1} parent=35 // pred_fallthru
          _
      $region36: #{patch_merging_forward.1} parent=5 // pred_fallthru
        _
      %p718 = scmp.le.s32.totalorder 2, %s13
      // Predicated region
      $region41: #{patch_merging_forward.1} parent=5 // pred_check
        %p719 = pneg %p718
      $region42: #{patch_merging_forward.1} parent=5 // pred_check_branch
        %721 = sbr.rel (%p719) target = $region44
      $region43: #{patch_merging_forward.1} parent=5 // pred_region
        %s722 = ssub.s32 %s13, 2
        // Predicated region
        $region45: #{patch_merging_forward.1} parent=43 // pred_check
          %p723 = pneg %p147
        $region46: #{patch_merging_forward.1} parent=43 // pred_check_branch
          %725 = sbr.rel (%p723) target = $region48
        $region47: #{patch_merging_forward.1} parent=43 // pred_region
          %s726 = sand.u32 %s132, 1
          %s727 = scalar_lea.sflag [#allocation3], %s726
          %s728 = sand.u32 %s132, 1
          %s729 = smul.addr %s728, 16
          %s730 = scalar_lea.vmem [#allocation2], %s729
          %732 = dma.done %s727, 256
        $region48: #{patch_merging_forward.1} parent=43 // pred_fallthru
          _
      $region44: #{patch_merging_forward.1} parent=5 // pred_fallthru
        _
    $region6: #{patch_merging_forward.1} parent=1 // loop_footer
      %s17 = sadd.s32 1, %s13
    $region7: #{patch_merging_forward.1} parent=1 // loop_footer_branch
      %12 = sbr.rel target = $region3
    $region8: #{patch_merging_forward.1} parent=1 // loop_exit
      _
    %733 = vsyncpa [#allocation3], 1
    %s734 = scalar_lea.sflag [#allocation3], 1
    %735 = vsyncpa %s734, 1

</llo_original>
